<compile_context>
chip_gen: v7x
topology: tpu7x:2x2x1
jax: 0.10.0
libtpu: 0.0.40
codegen_flags: <defaults>
</compile_context>

<pallas_src>
import jax
import jax.numpy as jnp
from jax import lax
from jax.experimental import pallas as pl
from jax.experimental.pallas import tpu as pltpu


def lstm_tagger_kernel(x_ref, wih_ref, whh_ref, b_ref, wout_ref, bout_ref,
                       out_ref):
    """x_ref: (T*Bp, E) bf16.  Gate weights pre-transposed, i/f/o columns
    pre-scaled by 0.5.  out_ref: (Bp, Op) f32, Op lane-dense (>=128)."""
    TB, _ = x_ref.shape
    H = whh_ref.shape[0]
    Bp = out_ref.shape[0]
    T = TB // Bp                                 # static Python int

    # ---- Hoisted input projection: all timesteps, one bf16 MXU matmul. ----
    gx = (jnp.dot(x_ref[...], wih_ref[...],
                  preferred_element_type=jnp.float32)
          + b_ref[...])                          # (T*Bp, 4H) f32, order i,f,g,o

    # Static, sublane-aligned (Bp is a multiple of 8) slices -> register
    # resident per-step gate blocks; no VMEM scratch round-trip.
    gx_steps = [gx[t * Bp:(t + 1) * Bp, :] for t in range(T)]

    whh = whh_ref[...]                           # (H, 4H) bf16, loop-invariant

    h = jnp.zeros((Bp, H), jnp.float32)
    c = jnp.zeros((Bp, H), jnp.float32)

    # ---- Serial recurrence (fully unrolled, T is small & static). ----
    for t in range(T):
        gates = gx_steps[t] + jnp.dot(h.astype(jnp.bfloat16), whh,
                                      preferred_element_type=jnp.float32)
        # Single full-width tanh.  sigmoid(x) = 0.5*(tanh(x/2)+1); the /2 was
        # folded into the i/f/o weight/bias columns in the wrapper.
        tg = jnp.tanh(gates)                     # one EUP pass over (Bp, 4H)
        i_g = 0.5 * (tg[:, 0 * H:1 * H] + 1.0)
        f_g = 0.5 * (tg[:, 1 * H:2 * H] + 1.0)
        g_g = tg[:, 2 * H:3 * H]
        o_g = 0.5 * (tg[:, 3 * H:4 * H] + 1.0)

        c = f_g * c + i_g * g_g
        h = o_g * jnp.tanh(c)

    # ---- Output projection (one-time epilogue, f32, lane-dense store). ----
    out_ref[...] = (jnp.dot(h, wout_ref[...],
                            preferred_element_type=jnp.float32)
                    + bout_ref[...]).astype(out_ref.dtype)


@jax.jit
def lstm_tagger_forward(x, w_ih, w_hh, b_ih, b_hh, w_out, b_out):
    """x: (T, B, E).  Returns (B, output_size) = Linear(h_T) = LSTMTagger fwd."""
    T, B, E = x.shape
    H = w_hh.shape[1]
    O = w_out.shape[0]

    # Pad batch to the f32 sublane granularity (8); activations stay f32.
    Bp = max(8, ((B + 7) // 8) * 8)
    # Pad output features to a full 128-lane block (unmasked epilogue vst).
    Op = max(128, ((O + 127) // 128) * 128)

    xp = jnp.zeros((T, Bp, E), jnp.float32).at[:, :B, :].set(
        x.astype(jnp.float32))
    x2d = xp.reshape(T * Bp, E).astype(jnp.bfloat16)   # MXU operand dtype

    # Column scale folding sigmoid(x)=0.5*(tanh(x/2)+1): halve i/f/o columns,
    # leave the g (cell candidate) column untouched.
    col_scale = jnp.concatenate([
        jnp.full((H,), 0.5, jnp.float32),   # i
        jnp.full((H,), 0.5, jnp.float32),   # f
        jnp.ones((H,), jnp.float32),        # g
        jnp.full((H,), 0.5, jnp.float32),   # o
    ])                                       # (4H,)

    wih_t = (jnp.transpose(w_ih).astype(jnp.float32) * col_scale
             ).astype(jnp.bfloat16)                       # (E, 4H)
    whh_t = (jnp.transpose(w_hh).astype(jnp.float32) * col_scale
             ).astype(jnp.bfloat16)                       # (H, 4H)
    bias = ((b_ih + b_hh).astype(jnp.float32) * col_scale
            ).reshape(1, 4 * H)                           # (1, 4H) f32

    wout_t = jnp.zeros((H, Op), jnp.float32).at[:, :O].set(
        jnp.transpose(w_out).astype(jnp.float32))         # (H, Op)
    bout = jnp.zeros((1, Op), jnp.float32).at[:, :O].set(
        b_out.astype(jnp.float32))                        # (1, Op)

    out = pl.pallas_call(
        lstm_tagger_kernel,
        out_shape=jax.ShapeDtypeStruct((Bp, Op), jnp.float32),
        in_specs=[pl.BlockSpec(memory_space=pltpu.MemorySpace.VMEM)] * 6,
        out_specs=pl.BlockSpec(memory_space=pltpu.MemorySpace.VMEM),
    )(x2d, wih_t, whh_t, bias, wout_t, bout)

    return out[:B, :O]


def lstm_tagger_reference(x, w_ih, w_hh, b_ih, b_hh, w_out, b_out):
    """Pure-JAX f32 reference matching torch.nn.LSTM + Linear semantics."""
    T, B, E = x.shape
    H = w_hh.shape[1]

    def step(carry, x_t):
        h, c = carry
        gates = x_t @ w_ih.T + b_ih + h @ w_hh.T + b_hh
        i = jax.nn.sigmoid(gates[:, 0 * H:1 * H])
        f = jax.nn.sigmoid(gates[:, 1 * H:2 * H])
        g = jnp.tanh(gates[:, 2 * H:3 * H])
        o = jax.nn.sigmoid(gates[:, 3 * H:4 * H])
        c = f * c + i * g
        h = o * jnp.tanh(c)
        return (h, c), h

    h0 = jnp.zeros((B, H), jnp.float32)
    c0 = jnp.zeros((B, H), jnp.float32)
    (h_T, _), _ = lax.scan(step, (h0, c0), x)
    return h_T @ w_out.T + b_out


if __name__ == "__main__":
    # Module hyperparameters (deterministic synthetic init, no checkpoint load).
    embedding_dim = 16
    hidden_dim = 32
    output_size = 8
    seq_len = 8
    batch = 2

    key = jax.random.PRNGKey(0)
    ks = jax.random.split(key, 8)
    bound = 1.0 / jnp.sqrt(hidden_dim)

    # nn.LSTM(embedding_dim, hidden_dim) parameters, gate order (i, f, g, o).
    w_ih = jax.random.uniform(ks[0], (4 * hidden_dim, embedding_dim),
                              jnp.float32, -bound, bound)
    w_hh = jax.random.uniform(ks[1], (4 * hidden_dim, hidden_dim),
                              jnp.float32, -bound, bound)
    b_ih = jax.random.uniform(ks[2], (4 * hidden_dim,), jnp.float32, -bound, bound)
    b_hh = jax.random.uniform(ks[3], (4 * hidden_dim,), jnp.float32, -bound, bound)
    # nn.Linear(hidden_dim, output_size) parameters.
    w_out = jax.random.uniform(ks[4], (output_size, hidden_dim),
                               jnp.float32, -bound, bound)
    b_out = jax.random.uniform(ks[5], (output_size,), jnp.float32, -bound, bound)

    # Input sequence: (seq_len, batch, embedding_dim) — PyTorch LSTM default layout.
    x = jax.random.normal(ks[6], (seq_len, batch, embedding_dim), jnp.float32)

    out = lstm_tagger_forward(x, w_ih, w_hh, b_ih, b_hh, w_out, b_out)
    out = jax.block_until_ready(out)

    ref = lstm_tagger_reference(x, w_ih, w_hh, b_ih, b_hh, w_out, b_out)
    assert out.shape == (batch, output_size)
    # bf16 MXU operands (f32 accumulation) -> relaxed tolerance vs f32 reference.
    assert jnp.allclose(out, ref, atol=2e-2, rtol=2e-2), (out, ref)

    print("KERNEL_OK")
</pallas_src>

<mosaic_0001>
module attributes {stable_mosaic.version = 11 : i64} {
  func.func @lstm_tagger_kernel(%arg0: memref<64x16xbf16, #tpu.memory_space<vmem>>, %arg1: memref<16x128xbf16, #tpu.memory_space<vmem>>, %arg2: memref<32x128xbf16, #tpu.memory_space<vmem>>, %arg3: memref<1x128xf32, #tpu.memory_space<vmem>>, %arg4: memref<32x128xf32, #tpu.memory_space<vmem>>, %arg5: memref<1x128xf32, #tpu.memory_space<vmem>>, %arg6: memref<8x128xf32, #tpu.memory_space<vmem>>) attributes {dimension_semantics = [], scalar_prefetch = 0 : i64, scratch_operands = 0 : i64, tpu.core_type = #tpu.core_type<tc>} {
    %c0 = arith.constant 0 : index
    %c0_0 = arith.constant 0 : index
    %0 = vector.load %arg0[%c0, %c0_0] : memref<64x16xbf16, #tpu.memory_space<vmem>>, vector<64x16xbf16>
    %c0_1 = arith.constant 0 : index
    %c0_2 = arith.constant 0 : index
    %1 = vector.load %arg1[%c0_1, %c0_2] : memref<16x128xbf16, #tpu.memory_space<vmem>>, vector<16x128xbf16>
    %cst = arith.constant dense<0.000000e+00> : vector<64x128xf32>
    %2 = tpu.matmul %0, %1, %cst {dimension_numbers = #tpu.dot_dimension_numbers<[1], [0], [0], [1], [0, 0, 1, 1], [], []>} : vector<64x16xbf16>, vector<16x128xbf16>, vector<64x128xf32> -> vector<64x128xf32>
    %c0_3 = arith.constant 0 : index
    %c0_4 = arith.constant 0 : index
    %3 = vector.load %arg3[%c0_3, %c0_4] : memref<1x128xf32, #tpu.memory_space<vmem>>, vector<1x128xf32>
    %4 = vector.broadcast %3 : vector<1x128xf32> to vector<64x128xf32>
    %5 = arith.addf %2, %4 : vector<64x128xf32>
    %6 = vector.extract_strided_slice %5 {offsets = [0, 0], sizes = [8, 128], strides = [1, 1]} : vector<64x128xf32> to vector<8x128xf32>
    %7 = vector.extract_strided_slice %5 {offsets = [8, 0], sizes = [8, 128], strides = [1, 1]} : vector<64x128xf32> to vector<8x128xf32>
    %8 = vector.extract_strided_slice %5 {offsets = [16, 0], sizes = [8, 128], strides = [1, 1]} : vector<64x128xf32> to vector<8x128xf32>
    %9 = vector.extract_strided_slice %5 {offsets = [24, 0], sizes = [8, 128], strides = [1, 1]} : vector<64x128xf32> to vector<8x128xf32>
    %10 = vector.extract_strided_slice %5 {offsets = [32, 0], sizes = [8, 128], strides = [1, 1]} : vector<64x128xf32> to vector<8x128xf32>
    %11 = vector.extract_strided_slice %5 {offsets = [40, 0], sizes = [8, 128], strides = [1, 1]} : vector<64x128xf32> to vector<8x128xf32>
    %12 = vector.extract_strided_slice %5 {offsets = [48, 0], sizes = [8, 128], strides = [1, 1]} : vector<64x128xf32> to vector<8x128xf32>
    %13 = vector.extract_strided_slice %5 {offsets = [56, 0], sizes = [8, 128], strides = [1, 1]} : vector<64x128xf32> to vector<8x128xf32>
    %c0_5 = arith.constant 0 : index
    %c0_6 = arith.constant 0 : index
    %14 = vector.load %arg2[%c0_5, %c0_6] : memref<32x128xbf16, #tpu.memory_space<vmem>>, vector<32x128xbf16>
    %cst_7 = arith.constant 0.000000e+00 : f32
    %15 = vector.broadcast %cst_7 : f32 to vector<8x32xf32>
    %cst_8 = arith.constant 0.000000e+00 : f32
    %16 = vector.broadcast %cst_8 : f32 to vector<8x32xf32>
    %17 = arith.truncf %15 : vector<8x32xf32> to vector<8x32xbf16>
    %cst_9 = arith.constant dense<0.000000e+00> : vector<8x128xf32>
    %18 = tpu.matmul %17, %14, %cst_9 {dimension_numbers = #tpu.dot_dimension_numbers<[1], [0], [0], [1], [0, 0, 1, 1], [], []>} : vector<8x32xbf16>, vector<32x128xbf16>, vector<8x128xf32> -> vector<8x128xf32>
    %19 = arith.addf %6, %18 : vector<8x128xf32>
    %20 = math.tanh %19 : vector<8x128xf32>
    %21 = vector.extract_strided_slice %20 {offsets = [0, 0], sizes = [8, 32], strides = [1, 1]} : vector<8x128xf32> to vector<8x32xf32>
    %cst_10 = arith.constant 1.000000e+00 : f32
    %22 = vector.broadcast %cst_10 : f32 to vector<8x32xf32>
    %23 = arith.addf %21, %22 : vector<8x32xf32>
    %cst_11 = arith.constant 5.000000e-01 : f32
    %24 = vector.broadcast %cst_11 : f32 to vector<8x32xf32>
    %25 = arith.mulf %24, %23 : vector<8x32xf32>
    %26 = vector.extract_strided_slice %20 {offsets = [0, 32], sizes = [8, 32], strides = [1, 1]} : vector<8x128xf32> to vector<8x32xf32>
    %cst_12 = arith.constant 1.000000e+00 : f32
    %27 = vector.broadcast %cst_12 : f32 to vector<8x32xf32>
    %28 = arith.addf %26, %27 : vector<8x32xf32>
    %cst_13 = arith.constant 5.000000e-01 : f32
    %29 = vector.broadcast %cst_13 : f32 to vector<8x32xf32>
    %30 = arith.mulf %29, %28 : vector<8x32xf32>
    %31 = vector.extract_strided_slice %20 {offsets = [0, 64], sizes = [8, 32], strides = [1, 1]} : vector<8x128xf32> to vector<8x32xf32>
    %32 = vector.extract_strided_slice %20 {offsets = [0, 96], sizes = [8, 32], strides = [1, 1]} : vector<8x128xf32> to vector<8x32xf32>
    %cst_14 = arith.constant 1.000000e+00 : f32
    %33 = vector.broadcast %cst_14 : f32 to vector<8x32xf32>
    %34 = arith.addf %32, %33 : vector<8x32xf32>
    %cst_15 = arith.constant 5.000000e-01 : f32
    %35 = vector.broadcast %cst_15 : f32 to vector<8x32xf32>
    %36 = arith.mulf %35, %34 : vector<8x32xf32>
    %37 = arith.mulf %30, %16 : vector<8x32xf32>
    %38 = arith.mulf %25, %31 : vector<8x32xf32>
    %39 = arith.addf %37, %38 : vector<8x32xf32>
    %40 = math.tanh %39 : vector<8x32xf32>
    %41 = arith.mulf %36, %40 : vector<8x32xf32>
    %42 = arith.truncf %41 : vector<8x32xf32> to vector<8x32xbf16>
    %cst_16 = arith.constant dense<0.000000e+00> : vector<8x128xf32>
    %43 = tpu.matmul %42, %14, %cst_16 {dimension_numbers = #tpu.dot_dimension_numbers<[1], [0], [0], [1], [0, 0, 1, 1], [], []>} : vector<8x32xbf16>, vector<32x128xbf16>, vector<8x128xf32> -> vector<8x128xf32>
    %44 = arith.addf %7, %43 : vector<8x128xf32>
    %45 = math.tanh %44 : vector<8x128xf32>
    %46 = vector.extract_strided_slice %45 {offsets = [0, 0], sizes = [8, 32], strides = [1, 1]} : vector<8x128xf32> to vector<8x32xf32>
    %cst_17 = arith.constant 1.000000e+00 : f32
    %47 = vector.broadcast %cst_17 : f32 to vector<8x32xf32>
    %48 = arith.addf %46, %47 : vector<8x32xf32>
    %cst_18 = arith.constant 5.000000e-01 : f32
    %49 = vector.broadcast %cst_18 : f32 to vector<8x32xf32>
    %50 = arith.mulf %49, %48 : vector<8x32xf32>
    %51 = vector.extract_strided_slice %45 {offsets = [0, 32], sizes = [8, 32], strides = [1, 1]} : vector<8x128xf32> to vector<8x32xf32>
    %cst_19 = arith.constant 1.000000e+00 : f32
    %52 = vector.broadcast %cst_19 : f32 to vector<8x32xf32>
    %53 = arith.addf %51, %52 : vector<8x32xf32>
    %cst_20 = arith.constant 5.000000e-01 : f32
    %54 = vector.broadcast %cst_20 : f32 to vector<8x32xf32>
    %55 = arith.mulf %54, %53 : vector<8x32xf32>
    %56 = vector.extract_strided_slice %45 {offsets = [0, 64], sizes = [8, 32], strides = [1, 1]} : vector<8x128xf32> to vector<8x32xf32>
    %57 = vector.extract_strided_slice %45 {offsets = [0, 96], sizes = [8, 32], strides = [1, 1]} : vector<8x128xf32> to vector<8x32xf32>
    %cst_21 = arith.constant 1.000000e+00 : f32
    %58 = vector.broadcast %cst_21 : f32 to vector<8x32xf32>
    %59 = arith.addf %57, %58 : vector<8x32xf32>
    %cst_22 = arith.constant 5.000000e-01 : f32
    %60 = vector.broadcast %cst_22 : f32 to vector<8x32xf32>
    %61 = arith.mulf %60, %59 : vector<8x32xf32>
    %62 = arith.mulf %55, %39 : vector<8x32xf32>
    %63 = arith.mulf %50, %56 : vector<8x32xf32>
    %64 = arith.addf %62, %63 : vector<8x32xf32>
    %65 = math.tanh %64 : vector<8x32xf32>
    %66 = arith.mulf %61, %65 : vector<8x32xf32>
    %67 = arith.truncf %66 : vector<8x32xf32> to vector<8x32xbf16>
    %cst_23 = arith.constant dense<0.000000e+00> : vector<8x128xf32>
    %68 = tpu.matmul %67, %14, %cst_23 {dimension_numbers = #tpu.dot_dimension_numbers<[1], [0], [0], [1], [0, 0, 1, 1], [], []>} : vector<8x32xbf16>, vector<32x128xbf16>, vector<8x128xf32> -> vector<8x128xf32>
    %69 = arith.addf %8, %68 : vector<8x128xf32>
    %70 = math.tanh %69 : vector<8x128xf32>
    %71 = vector.extract_strided_slice %70 {offsets = [0, 0], sizes = [8, 32], strides = [1, 1]} : vector<8x128xf32> to vector<8x32xf32>
    %cst_24 = arith.constant 1.000000e+00 : f32
    %72 = vector.broadcast %cst_24 : f32 to vector<8x32xf32>
    %73 = arith.addf %71, %72 : vector<8x32xf32>
    %cst_25 = arith.constant 5.000000e-01 : f32
    %74 = vector.broadcast %cst_25 : f32 to vector<8x32xf32>
    %75 = arith.mulf %74, %73 : vector<8x32xf32>
    %76 = vector.extract_strided_slice %70 {offsets = [0, 32], sizes = [8, 32], strides = [1, 1]} : vector<8x128xf32> to vector<8x32xf32>
    %cst_26 = arith.constant 1.000000e+00 : f32
    %77 = vector.broadcast %cst_26 : f32 to vector<8x32xf32>
    %78 = arith.addf %76, %77 : vector<8x32xf32>
    %cst_27 = arith.constant 5.000000e-01 : f32
    %79 = vector.broadcast %cst_27 : f32 to vector<8x32xf32>
    %80 = arith.mulf %79, %78 : vector<8x32xf32>
    %81 = vector.extract_strided_slice %70 {offsets = [0, 64], sizes = [8, 32], strides = [1, 1]} : vector<8x128xf32> to vector<8x32xf32>
    %82 = vector.extract_strided_slice %70 {offsets = [0, 96], sizes = [8, 32], strides = [1, 1]} : vector<8x128xf32> to vector<8x32xf32>
    %cst_28 = arith.constant 1.000000e+00 : f32
    %83 = vector.broadcast %cst_28 : f32 to vector<8x32xf32>
    %84 = arith.addf %82, %83 : vector<8x32xf32>
    %cst_29 = arith.constant 5.000000e-01 : f32
    %85 = vector.broadcast %cst_29 : f32 to vector<8x32xf32>
    %86 = arith.mulf %85, %84 : vector<8x32xf32>
    %87 = arith.mulf %80, %64 : vector<8x32xf32>
    %88 = arith.mulf %75, %81 : vector<8x32xf32>
    %89 = arith.addf %87, %88 : vector<8x32xf32>
    %90 = math.tanh %89 : vector<8x32xf32>
    %91 = arith.mulf %86, %90 : vector<8x32xf32>
    %92 = arith.truncf %91 : vector<8x32xf32> to vector<8x32xbf16>
    %cst_30 = arith.constant dense<0.000000e+00> : vector<8x128xf32>
    %93 = tpu.matmul %92, %14, %cst_30 {dimension_numbers = #tpu.dot_dimension_numbers<[1], [0], [0], [1], [0, 0, 1, 1], [], []>} : vector<8x32xbf16>, vector<32x128xbf16>, vector<8x128xf32> -> vector<8x128xf32>
    %94 = arith.addf %9, %93 : vector<8x128xf32>
    %95 = math.tanh %94 : vector<8x128xf32>
    %96 = vector.extract_strided_slice %95 {offsets = [0, 0], sizes = [8, 32], strides = [1, 1]} : vector<8x128xf32> to vector<8x32xf32>
    %cst_31 = arith.constant 1.000000e+00 : f32
    %97 = vector.broadcast %cst_31 : f32 to vector<8x32xf32>
    %98 = arith.addf %96, %97 : vector<8x32xf32>
    %cst_32 = arith.constant 5.000000e-01 : f32
    %99 = vector.broadcast %cst_32 : f32 to vector<8x32xf32>
    %100 = arith.mulf %99, %98 : vector<8x32xf32>
    %101 = vector.extract_strided_slice %95 {offsets = [0, 32], sizes = [8, 32], strides = [1, 1]} : vector<8x128xf32> to vector<8x32xf32>
    %cst_33 = arith.constant 1.000000e+00 : f32
    %102 = vector.broadcast %cst_33 : f32 to vector<8x32xf32>
    %103 = arith.addf %101, %102 : vector<8x32xf32>
    %cst_34 = arith.constant 5.000000e-01 : f32
    %104 = vector.broadcast %cst_34 : f32 to vector<8x32xf32>
    %105 = arith.mulf %104, %103 : vector<8x32xf32>
    %106 = vector.extract_strided_slice %95 {offsets = [0, 64], sizes = [8, 32], strides = [1, 1]} : vector<8x128xf32> to vector<8x32xf32>
    %107 = vector.extract_strided_slice %95 {offsets = [0, 96], sizes = [8, 32], strides = [1, 1]} : vector<8x128xf32> to vector<8x32xf32>
    %cst_35 = arith.constant 1.000000e+00 : f32
    %108 = vector.broadcast %cst_35 : f32 to vector<8x32xf32>
    %109 = arith.addf %107, %108 : vector<8x32xf32>
    %cst_36 = arith.constant 5.000000e-01 : f32
    %110 = vector.broadcast %cst_36 : f32 to vector<8x32xf32>
    %111 = arith.mulf %110, %109 : vector<8x32xf32>
    %112 = arith.mulf %105, %89 : vector<8x32xf32>
    %113 = arith.mulf %100, %106 : vector<8x32xf32>
    %114 = arith.addf %112, %113 : vector<8x32xf32>
    %115 = math.tanh %114 : vector<8x32xf32>
    %116 = arith.mulf %111, %115 : vector<8x32xf32>
    %117 = arith.truncf %116 : vector<8x32xf32> to vector<8x32xbf16>
    %cst_37 = arith.constant dense<0.000000e+00> : vector<8x128xf32>
    %118 = tpu.matmul %117, %14, %cst_37 {dimension_numbers = #tpu.dot_dimension_numbers<[1], [0], [0], [1], [0, 0, 1, 1], [], []>} : vector<8x32xbf16>, vector<32x128xbf16>, vector<8x128xf32> -> vector<8x128xf32>
    %119 = arith.addf %10, %118 : vector<8x128xf32>
    %120 = math.tanh %119 : vector<8x128xf32>
    %121 = vector.extract_strided_slice %120 {offsets = [0, 0], sizes = [8, 32], strides = [1, 1]} : vector<8x128xf32> to vector<8x32xf32>
    %cst_38 = arith.constant 1.000000e+00 : f32
    %122 = vector.broadcast %cst_38 : f32 to vector<8x32xf32>
    %123 = arith.addf %121, %122 : vector<8x32xf32>
    %cst_39 = arith.constant 5.000000e-01 : f32
    %124 = vector.broadcast %cst_39 : f32 to vector<8x32xf32>
    %125 = arith.mulf %124, %123 : vector<8x32xf32>
    %126 = vector.extract_strided_slice %120 {offsets = [0, 32], sizes = [8, 32], strides = [1, 1]} : vector<8x128xf32> to vector<8x32xf32>
    %cst_40 = arith.constant 1.000000e+00 : f32
    %127 = vector.broadcast %cst_40 : f32 to vector<8x32xf32>
    %128 = arith.addf %126, %127 : vector<8x32xf32>
    %cst_41 = arith.constant 5.000000e-01 : f32
    %129 = vector.broadcast %cst_41 : f32 to vector<8x32xf32>
    %130 = arith.mulf %129, %128 : vector<8x32xf32>
    %131 = vector.extract_strided_slice %120 {offsets = [0, 64], sizes = [8, 32], strides = [1, 1]} : vector<8x128xf32> to vector<8x32xf32>
    %132 = vector.extract_strided_slice %120 {offsets = [0, 96], sizes = [8, 32], strides = [1, 1]} : vector<8x128xf32> to vector<8x32xf32>
    %cst_42 = arith.constant 1.000000e+00 : f32
    %133 = vector.broadcast %cst_42 : f32 to vector<8x32xf32>
    %134 = arith.addf %132, %133 : vector<8x32xf32>
    %cst_43 = arith.constant 5.000000e-01 : f32
    %135 = vector.broadcast %cst_43 : f32 to vector<8x32xf32>
    %136 = arith.mulf %135, %134 : vector<8x32xf32>
    %137 = arith.mulf %130, %114 : vector<8x32xf32>
    %138 = arith.mulf %125, %131 : vector<8x32xf32>
    %139 = arith.addf %137, %138 : vector<8x32xf32>
    %140 = math.tanh %139 : vector<8x32xf32>
    %141 = arith.mulf %136, %140 : vector<8x32xf32>
    %142 = arith.truncf %141 : vector<8x32xf32> to vector<8x32xbf16>
    %cst_44 = arith.constant dense<0.000000e+00> : vector<8x128xf32>
    %143 = tpu.matmul %142, %14, %cst_44 {dimension_numbers = #tpu.dot_dimension_numbers<[1], [0], [0], [1], [0, 0, 1, 1], [], []>} : vector<8x32xbf16>, vector<32x128xbf16>, vector<8x128xf32> -> vector<8x128xf32>
    %144 = arith.addf %11, %143 : vector<8x128xf32>
    %145 = math.tanh %144 : vector<8x128xf32>
    %146 = vector.extract_strided_slice %145 {offsets = [0, 0], sizes = [8, 32], strides = [1, 1]} : vector<8x128xf32> to vector<8x32xf32>
    %cst_45 = arith.constant 1.000000e+00 : f32
    %147 = vector.broadcast %cst_45 : f32 to vector<8x32xf32>
    %148 = arith.addf %146, %147 : vector<8x32xf32>
    %cst_46 = arith.constant 5.000000e-01 : f32
    %149 = vector.broadcast %cst_46 : f32 to vector<8x32xf32>
    %150 = arith.mulf %149, %148 : vector<8x32xf32>
    %151 = vector.extract_strided_slice %145 {offsets = [0, 32], sizes = [8, 32], strides = [1, 1]} : vector<8x128xf32> to vector<8x32xf32>
    %cst_47 = arith.constant 1.000000e+00 : f32
    %152 = vector.broadcast %cst_47 : f32 to vector<8x32xf32>
    %153 = arith.addf %151, %152 : vector<8x32xf32>
    %cst_48 = arith.constant 5.000000e-01 : f32
    %154 = vector.broadcast %cst_48 : f32 to vector<8x32xf32>
    %155 = arith.mulf %154, %153 : vector<8x32xf32>
    %156 = vector.extract_strided_slice %145 {offsets = [0, 64], sizes = [8, 32], strides = [1, 1]} : vector<8x128xf32> to vector<8x32xf32>
    %157 = vector.extract_strided_slice %145 {offsets = [0, 96], sizes = [8, 32], strides = [1, 1]} : vector<8x128xf32> to vector<8x32xf32>
    %cst_49 = arith.constant 1.000000e+00 : f32
    %158 = vector.broadcast %cst_49 : f32 to vector<8x32xf32>
    %159 = arith.addf %157, %158 : vector<8x32xf32>
    %cst_50 = arith.constant 5.000000e-01 : f32
    %160 = vector.broadcast %cst_50 : f32 to vector<8x32xf32>
    %161 = arith.mulf %160, %159 : vector<8x32xf32>
    %162 = arith.mulf %155, %139 : vector<8x32xf32>
    %163 = arith.mulf %150, %156 : vector<8x32xf32>
    %164 = arith.addf %162, %163 : vector<8x32xf32>
    %165 = math.tanh %164 : vector<8x32xf32>
    %166 = arith.mulf %161, %165 : vector<8x32xf32>
    %167 = arith.truncf %166 : vector<8x32xf32> to vector<8x32xbf16>
    %cst_51 = arith.constant dense<0.000000e+00> : vector<8x128xf32>
    %168 = tpu.matmul %167, %14, %cst_51 {dimension_numbers = #tpu.dot_dimension_numbers<[1], [0], [0], [1], [0, 0, 1, 1], [], []>} : vector<8x32xbf16>, vector<32x128xbf16>, vector<8x128xf32> -> vector<8x128xf32>
    %169 = arith.addf %12, %168 : vector<8x128xf32>
    %170 = math.tanh %169 : vector<8x128xf32>
    %171 = vector.extract_strided_slice %170 {offsets = [0, 0], sizes = [8, 32], strides = [1, 1]} : vector<8x128xf32> to vector<8x32xf32>
    %cst_52 = arith.constant 1.000000e+00 : f32
    %172 = vector.broadcast %cst_52 : f32 to vector<8x32xf32>
    %173 = arith.addf %171, %172 : vector<8x32xf32>
    %cst_53 = arith.constant 5.000000e-01 : f32
    %174 = vector.broadcast %cst_53 : f32 to vector<8x32xf32>
    %175 = arith.mulf %174, %173 : vector<8x32xf32>
    %176 = vector.extract_strided_slice %170 {offsets = [0, 32], sizes = [8, 32], strides = [1, 1]} : vector<8x128xf32> to vector<8x32xf32>
    %cst_54 = arith.constant 1.000000e+00 : f32
    %177 = vector.broadcast %cst_54 : f32 to vector<8x32xf32>
    %178 = arith.addf %176, %177 : vector<8x32xf32>
    %cst_55 = arith.constant 5.000000e-01 : f32
    %179 = vector.broadcast %cst_55 : f32 to vector<8x32xf32>
    %180 = arith.mulf %179, %178 : vector<8x32xf32>
    %181 = vector.extract_strided_slice %170 {offsets = [0, 64], sizes = [8, 32], strides = [1, 1]} : vector<8x128xf32> to vector<8x32xf32>
    %182 = vector.extract_strided_slice %170 {offsets = [0, 96], sizes = [8, 32], strides = [1, 1]} : vector<8x128xf32> to vector<8x32xf32>
    %cst_56 = arith.constant 1.000000e+00 : f32
    %183 = vector.broadcast %cst_56 : f32 to vector<8x32xf32>
    %184 = arith.addf %182, %183 : vector<8x32xf32>
    %cst_57 = arith.constant 5.000000e-01 : f32
    %185 = vector.broadcast %cst_57 : f32 to vector<8x32xf32>
    %186 = arith.mulf %185, %184 : vector<8x32xf32>
    %187 = arith.mulf %180, %164 : vector<8x32xf32>
    %188 = arith.mulf %175, %181 : vector<8x32xf32>
    %189 = arith.addf %187, %188 : vector<8x32xf32>
    %190 = math.tanh %189 : vector<8x32xf32>
    %191 = arith.mulf %186, %190 : vector<8x32xf32>
    %192 = arith.truncf %191 : vector<8x32xf32> to vector<8x32xbf16>
    %cst_58 = arith.constant dense<0.000000e+00> : vector<8x128xf32>
    %193 = tpu.matmul %192, %14, %cst_58 {dimension_numbers = #tpu.dot_dimension_numbers<[1], [0], [0], [1], [0, 0, 1, 1], [], []>} : vector<8x32xbf16>, vector<32x128xbf16>, vector<8x128xf32> -> vector<8x128xf32>
    %194 = arith.addf %13, %193 : vector<8x128xf32>
    %195 = math.tanh %194 : vector<8x128xf32>
    %196 = vector.extract_strided_slice %195 {offsets = [0, 0], sizes = [8, 32], strides = [1, 1]} : vector<8x128xf32> to vector<8x32xf32>
    %cst_59 = arith.constant 1.000000e+00 : f32
    %197 = vector.broadcast %cst_59 : f32 to vector<8x32xf32>
    %198 = arith.addf %196, %197 : vector<8x32xf32>
    %cst_60 = arith.constant 5.000000e-01 : f32
    %199 = vector.broadcast %cst_60 : f32 to vector<8x32xf32>
    %200 = arith.mulf %199, %198 : vector<8x32xf32>
    %201 = vector.extract_strided_slice %195 {offsets = [0, 32], sizes = [8, 32], strides = [1, 1]} : vector<8x128xf32> to vector<8x32xf32>
    %cst_61 = arith.constant 1.000000e+00 : f32
    %202 = vector.broadcast %cst_61 : f32 to vector<8x32xf32>
    %203 = arith.addf %201, %202 : vector<8x32xf32>
    %cst_62 = arith.constant 5.000000e-01 : f32
    %204 = vector.broadcast %cst_62 : f32 to vector<8x32xf32>
    %205 = arith.mulf %204, %203 : vector<8x32xf32>
    %206 = vector.extract_strided_slice %195 {offsets = [0, 64], sizes = [8, 32], strides = [1, 1]} : vector<8x128xf32> to vector<8x32xf32>
    %207 = vector.extract_strided_slice %195 {offsets = [0, 96], sizes = [8, 32], strides = [1, 1]} : vector<8x128xf32> to vector<8x32xf32>
    %cst_63 = arith.constant 1.000000e+00 : f32
    %208 = vector.broadcast %cst_63 : f32 to vector<8x32xf32>
    %209 = arith.addf %207, %208 : vector<8x32xf32>
    %cst_64 = arith.constant 5.000000e-01 : f32
    %210 = vector.broadcast %cst_64 : f32 to vector<8x32xf32>
    %211 = arith.mulf %210, %209 : vector<8x32xf32>
    %212 = arith.mulf %205, %189 : vector<8x32xf32>
    %213 = arith.mulf %200, %206 : vector<8x32xf32>
    %214 = arith.addf %212, %213 : vector<8x32xf32>
    %215 = math.tanh %214 : vector<8x32xf32>
    %216 = arith.mulf %211, %215 : vector<8x32xf32>
    %c0_65 = arith.constant 0 : index
    %c0_66 = arith.constant 0 : index
    %217 = vector.load %arg4[%c0_65, %c0_66] : memref<32x128xf32, #tpu.memory_space<vmem>>, vector<32x128xf32>
    %cst_67 = arith.constant dense<0.000000e+00> : vector<8x128xf32>
    %218 = tpu.matmul %216, %217, %cst_67 {dimension_numbers = #tpu.dot_dimension_numbers<[1], [0], [0], [1], [0, 0, 1, 1], [], []>} : vector<8x32xf32>, vector<32x128xf32>, vector<8x128xf32> -> vector<8x128xf32>
    %c0_68 = arith.constant 0 : index
    %c0_69 = arith.constant 0 : index
    %219 = vector.load %arg5[%c0_68, %c0_69] : memref<1x128xf32, #tpu.memory_space<vmem>>, vector<1x128xf32>
    %220 = vector.broadcast %219 : vector<1x128xf32> to vector<8x128xf32>
    %221 = arith.addf %218, %220 : vector<8x128xf32>
    %c0_70 = arith.constant 0 : index
    %c0_71 = arith.constant 0 : index
    %222 = vector.load %arg6[%c0_70, %c0_71] : memref<8x128xf32, #tpu.memory_space<vmem>>, vector<8x128xf32>
    tpu.vector_store %arg6[%c0_70, %c0_71], %221 {strides = array<i32>} : memref<8x128xf32, #tpu.memory_space<vmem>>, vector<8x128xf32>,
    return
  }
}

</mosaic_0001>

<llo_original>
// kernel: lstm_tagger_forward.1
$region0: #{lstm_tagger_forward.1}
  #allocation0 [shape = 'u32[]', space=smem, size = 0x4, offset = 0x4, fixed_abs, tag = 'smem constant byte address 0x4 - core index']
  #allocation1 [shape = 'u32[144,128]{1,0:T(1,128)}', space=vmem, size = 0x12000, scoped, tag = 'internal scratch']
  %s0 = inlined_call_operand.vmem [shape: bf16[64,16], index: 0, kind: input, shape index: {}]
  %s1 = inlined_call_operand.vmem [shape: bf16[16,128], index: 1, kind: input, shape index: {}]
  %s2 = inlined_call_operand.vmem [shape: bf16[32,128], index: 2, kind: input, shape index: {}]
  %s3 = inlined_call_operand.vmem [shape: f32[1,128], index: 3, kind: input, shape index: {}]
  %s4 = inlined_call_operand.vmem [shape: f32[32,128], index: 4, kind: input, shape index: {}]
  %s5 = inlined_call_operand.vmem [shape: f32[1,128], index: 5, kind: input, shape index: {}]
  %s6 = inlined_call_operand.vmem [shape: f32[8,128], index: 6, kind: output, shape index: {}]
  %s7 = sld [smem:[#allocation0]]
  $region34: #{lstm_tagger_forward.1} parent=0
    _
  %s9 = ssub.s32 1, %s7
  %s10 = scalar_select 0, %s9, %s7
  // Predicated region
  $region2: #{lstm_tagger_forward.1} parent=0 // pred_check
    _
  $region3: #{lstm_tagger_forward.1} parent=0 // pred_check_branch
    %12 = sbr.rel (0) target = $region5
  $region4: #{lstm_tagger_forward.1} parent=0 // pred_region
    _
  $region5: #{lstm_tagger_forward.1} parent=0 // pred_fallthru
    _
  // Predicated region
  $region6: #{lstm_tagger_forward.1} parent=0 // pred_check
    _
  $region7: #{lstm_tagger_forward.1} parent=0 // pred_check_branch
    %14 = sbr.rel (0) target = $region9
  $region8: #{lstm_tagger_forward.1} parent=0 // pred_region
    _
  $region9: #{lstm_tagger_forward.1} parent=0 // pred_fallthru
    _
  // Predicated region
  $region10: #{lstm_tagger_forward.1} parent=0 // pred_check
    _
  $region11: #{lstm_tagger_forward.1} parent=0 // pred_check_branch
    %16 = sbr.rel (0) target = $region13
  $region12: #{lstm_tagger_forward.1} parent=0 // pred_region
    _
  $region13: #{lstm_tagger_forward.1} parent=0 // pred_fallthru
    _
  // Predicated region
  $region14: #{lstm_tagger_forward.1} parent=0 // pred_check
    _
  $region15: #{lstm_tagger_forward.1} parent=0 // pred_check_branch
    %18 = sbr.rel (0) target = $region17
  $region16: #{lstm_tagger_forward.1} parent=0 // pred_region
    _
  $region17: #{lstm_tagger_forward.1} parent=0 // pred_fallthru
    _
  // Predicated region
  $region18: #{lstm_tagger_forward.1} parent=0 // pred_check
    _
  $region19: #{lstm_tagger_forward.1} parent=0 // pred_check_branch
    %20 = sbr.rel (0) target = $region21
  $region20: #{lstm_tagger_forward.1} parent=0 // pred_region
    _
  $region21: #{lstm_tagger_forward.1} parent=0 // pred_fallthru
    _
  // Predicated region
  $region22: #{lstm_tagger_forward.1} parent=0 // pred_check
    _
  $region23: #{lstm_tagger_forward.1} parent=0 // pred_check_branch
    %22 = sbr.rel (0) target = $region25
  $region24: #{lstm_tagger_forward.1} parent=0 // pred_region
    _
  $region25: #{lstm_tagger_forward.1} parent=0 // pred_fallthru
    _
  %v24 = vld [vmem:[%s0] sm:$0xf]
  %v25 = vld [vmem:[%s0 + $0x4] sm:$0xf]
  %v26 = vld [vmem:[%s0 + $0x8] sm:$0xf]
  %v27 = vld [vmem:[%s0 + $0xc] sm:$0xf]
  %v28 = vld [vmem:[%s0 + $0x10] sm:$0xf]
  %v29 = vld [vmem:[%s0 + $0x14] sm:$0xf]
  %v30 = vld [vmem:[%s0 + $0x18] sm:$0xf]
  %v31 = vld [vmem:[%s0 + $0x1c] sm:$0xf]
  %v32 = vld [vmem:[%s1] sm:$0xf]
  %v33 = vld [vmem:[%s1 + $0x4] sm:$0xf]
  %v34 = vld [vmem:[%s3] sm:$0x1]
  %v36 = vlaneseq
  %v37 = vshrl.u32 %v36, 7
  %v38 = vsub.s32 0, %v37
  %v39 = vrot.slane %v34, %v38
  %v49 = vunpack.c.l.b16 %v24
  %v50 = vunpack.c.l.b16 %v25
  %v51 = vunpack.c.l.b16 %v26
  %v52 = vunpack.c.l.b16 %v27
  %v53 = vunpack.c.l.b16 %v28
  %v54 = vunpack.c.l.b16 %v29
  %v55 = vunpack.c.l.b16 %v30
  %v56 = vunpack.c.l.b16 %v31
  %v57 = vpack.c.b16 %v50, %v49
  %v58 = vpack.c.b16 %v52, %v51
  %v59 = vpack.c.b16 %v54, %v53
  %v60 = vpack.c.b16 %v56, %v55
  %v63 = vunpack.c.l.b16 %v32
  %v64 = vunpack.c.l.b16 %v33
  %v65 = vpack.c.b16 %v64, %v63
  %vm67 = vcmask 130048
  %v69 = vsel %vm67, %v57, 0
  %v72 = vsel %vm67, %v58, 0
  %v75 = vsel %vm67, %v59, 0
  %v78 = vsel %vm67, %v60, 0
  %80 = vmatprep.subr.bf16.mxu0 0
  %81 = vmatpush1.bf16.msra.mxu0 %v65
  %82 = vmatprep.subr.bf16.mxu0 0
  %83 = vmatpush1.bf16.msra.mxu0 0
  %84 = vmatprep.subr.bf16.mxu0 0
  %85 = vmatpush1.bf16.msra.mxu0 0
  %86 = vmatprep.subr.bf16.mxu0 0
  %87 = vmatpush1.bf16.msra.mxu0 0
  %88 = vmatprep.subr.bf16.mxu0 0
  %89 = vmatpush1.bf16.msra.mxu0 0
  %90 = vmatprep.subr.bf16.mxu0 0
  %91 = vmatpush1.bf16.msra.mxu0 0
  %92 = vmatprep.subr.bf16.mxu0 0
  %93 = vmatpush1.bf16.msra.mxu0 0
  %94 = vmatprep.subr.bf16.mxu0 0
  %95 = vmatpush1.bf16.msra.mxu0 0
  %96 = vmatprep.subr.bf16.mxu0 0
  %97 = vmatpush1.bf16.msra.mxu0 0
  %98 = vmatprep.subr.bf16.mxu0 0
  %99 = vmatpush1.bf16.msra.mxu0 0
  %100 = vmatprep.subr.bf16.mxu0 0
  %101 = vmatpush1.bf16.msra.mxu0 0
  %102 = vmatprep.subr.bf16.mxu0 0
  %103 = vmatpush1.bf16.msra.mxu0 0
  %104 = vmatprep.subr.bf16.mxu0 0
  %105 = vmatpush1.bf16.msra.mxu0 0
  %106 = vmatprep.subr.bf16.mxu0 0
  %107 = vmatpush1.bf16.msra.mxu0 0
  %108 = vmatprep.subr.bf16.mxu0 0
  %109 = vmatpush1.bf16.msra.mxu0 0
  %110 = vmatprep.subr.bf16.mxu0 0
  %111 = vmatpush1.bf16.msra.mxu0 0
  %112 = vmatprep.mubr.bf16.mxu0 0
  %113 = vmatmul.mubr.bf16.gmra.mrb[0].mxu0 %v69
  %v114 = vpop.f32.mrb[0].mxu0
  %v115 = vadd.f32 %v39, %v114
  %v116 = vpop.f32.mrb[0].mxu0
  %v117 = vpop.f32.mrb[0].mxu0
  %v118 = vadd.f32 %v39, %v117
  %v119 = vpop.f32.mrb[0].mxu0
  %120 = vmatprep.mubr.bf16.mxu0 0
  %121 = vmatmul.mubr.bf16.gmra.mrb[0].mxu0 %v72
  %v122 = vpop.f32.mrb[0].mxu0
  %v123 = vadd.f32 %v39, %v122
  %v124 = vpop.f32.mrb[0].mxu0
  %v125 = vpop.f32.mrb[0].mxu0
  %v126 = vadd.f32 %v39, %v125
  %v127 = vpop.f32.mrb[0].mxu0
  %128 = vmatprep.mubr.bf16.mxu0 0
  %129 = vmatmul.mubr.bf16.gmra.mrb[0].mxu0 %v75
  %v130 = vpop.f32.mrb[0].mxu0
  %v131 = vadd.f32 %v39, %v130
  %v132 = vpop.f32.mrb[0].mxu0
  %v133 = vpop.f32.mrb[0].mxu0
  %v134 = vadd.f32 %v39, %v133
  %v135 = vpop.f32.mrb[0].mxu0
  %136 = vmatprep.mubr.bf16.mxu0 0
  %137 = vmatmul.mubr.bf16.gmra.mrb[0].mxu0 %v78
  %v138 = vpop.f32.mrb[0].mxu0
  %v139 = vadd.f32 %v39, %v138
  %v140 = vpop.f32.mrb[0].mxu0
  %v141 = vpop.f32.mrb[0].mxu0
  %v142 = vadd.f32 %v39, %v141
  %v143 = vpop.f32.mrb[0].mxu0
  %144 = vdwg.mxu0
  %v145 = vld [vmem:[%s2] sm:$0xf]
  %v146 = vld [vmem:[%s2 + $0x4] sm:$0xf]
  %v147 = vld [vmem:[%s2 + $0x8] sm:$0xf]
  %v148 = vld [vmem:[%s2 + $0xc] sm:$0xf]
  %v153 = vunpack.c.l.b16 %v145
  %v154 = vunpack.c.l.b16 %v146
  %v155 = vunpack.c.l.b16 %v147
  %v156 = vunpack.c.l.b16 %v148
  %v157 = vpack.c.b16 %v154, %v153
  %v158 = vpack.c.b16 %v156, %v155
  %vm161 = vcmask 261120
  %v163 = vsel %vm161, 0, 0
  %165 = vmatprep.subr.bf16.mxu0 0
  %166 = vmatpush1.bf16.msra.mxu0 %v157
  %167 = vmatprep.subr.bf16.mxu0 0
  %168 = vmatpush1.bf16.msra.mxu0 %v158
  %169 = vmatprep.subr.bf16.mxu0 0
  %170 = vmatpush1.bf16.msra.mxu0 0
  %171 = vmatprep.subr.bf16.mxu0 0
  %172 = vmatpush1.bf16.msra.mxu0 0
  %173 = vmatprep.subr.bf16.mxu0 0
  %174 = vmatpush1.bf16.msra.mxu0 0
  %175 = vmatprep.subr.bf16.mxu0 0
  %176 = vmatpush1.bf16.msra.mxu0 0
  %177 = vmatprep.subr.bf16.mxu0 0
  %178 = vmatpush1.bf16.msra.mxu0 0
  %179 = vmatprep.subr.bf16.mxu0 0
  %180 = vmatpush1.bf16.msra.mxu0 0
  %181 = vmatprep.subr.bf16.mxu0 0
  %182 = vmatpush1.bf16.msra.mxu0 0
  %183 = vmatprep.subr.bf16.mxu0 0
  %184 = vmatpush1.bf16.msra.mxu0 0
  %185 = vmatprep.subr.bf16.mxu0 0
  %186 = vmatpush1.bf16.msra.mxu0 0
  %187 = vmatprep.subr.bf16.mxu0 0
  %188 = vmatpush1.bf16.msra.mxu0 0
  %189 = vmatprep.subr.bf16.mxu0 0
  %190 = vmatpush1.bf16.msra.mxu0 0
  %191 = vmatprep.subr.bf16.mxu0 0
  %192 = vmatpush1.bf16.msra.mxu0 0
  %193 = vmatprep.subr.bf16.mxu0 0
  %194 = vmatpush1.bf16.msra.mxu0 0
  %195 = vmatprep.subr.bf16.mxu0 0
  %196 = vmatpush1.bf16.msra.mxu0 0
  %197 = vmatprep.mubr.bf16.mxu0 0
  %198 = vmatmul.mubr.bf16.gmra.mrb[0].mxu0 %v163
  %v199 = vpop.f32.mrb[0].mxu0
  %v200 = vadd.f32 0.0, %v199
  %v201 = vpop.f32.mrb[0].mxu0
  %v202 = vpop.f32.mrb[0].mxu0
  %v203 = vpop.f32.mrb[0].mxu0
  %204 = vdwg.mxu0
  %v205 = vadd.f32 %v115, %v200
  %v206 = vtanh.pop %v205
  %v207 = vadd.f32 %v206, 1.0
  %v208 = vmul.f32 %v207, 0.5
  %v209 = vmul.f32 %v208, 0.0
  %211 = vrot.lane.b32.xlu0 %v206, 64
  %v212 = vpop.permute.xlu0 %211
  %v214 = vmul.f32 %v208, %v212
  %216 = vrot.lane.b32.xlu0 %v214, 32
  %v217 = vpop.permute.xlu0 %216
  %v219 = vadd.f32 %v209, %v217
  %v220 = vtanh.pop %v219
  %222 = vrot.lane.b32.xlu0 %v220, 64
  %v223 = vpop.permute.xlu0 %222
  %v225 = vmul.f32 %v208, %v223
  %v226 = vpack.c.bf16 %v225, %v225
  %228 = vrot.lane.b32.xlu0 %v226, 32
  %v229 = vpop.permute.xlu0 %228
  %v231 = vsel %vm161, %v229, 0
  %233 = vmatprep.subr.bf16.mxu0 0
  %234 = vmatpush1.bf16.msra.mxu0 %v157
  %235 = vmatprep.subr.bf16.mxu0 0
  %236 = vmatpush1.bf16.msra.mxu0 %v158
  %237 = vmatprep.subr.bf16.mxu0 0
  %238 = vmatpush1.bf16.msra.mxu0 0
  %239 = vmatprep.subr.bf16.mxu0 0
  %240 = vmatpush1.bf16.msra.mxu0 0
  %241 = vmatprep.subr.bf16.mxu0 0
  %242 = vmatpush1.bf16.msra.mxu0 0
  %243 = vmatprep.subr.bf16.mxu0 0
  %244 = vmatpush1.bf16.msra.mxu0 0
  %245 = vmatprep.subr.bf16.mxu0 0
  %246 = vmatpush1.bf16.msra.mxu0 0
  %247 = vmatprep.subr.bf16.mxu0 0
  %248 = vmatpush1.bf16.msra.mxu0 0
  %249 = vmatprep.subr.bf16.mxu0 0
  %250 = vmatpush1.bf16.msra.mxu0 0
  %251 = vmatprep.subr.bf16.mxu0 0
  %252 = vmatpush1.bf16.msra.mxu0 0
  %253 = vmatprep.subr.bf16.mxu0 0
  %254 = vmatpush1.bf16.msra.mxu0 0
  %255 = vmatprep.subr.bf16.mxu0 0
  %256 = vmatpush1.bf16.msra.mxu0 0
  %257 = vmatprep.subr.bf16.mxu0 0
  %258 = vmatpush1.bf16.msra.mxu0 0
  %259 = vmatprep.subr.bf16.mxu0 0
  %260 = vmatpush1.bf16.msra.mxu0 0
  %261 = vmatprep.subr.bf16.mxu0 0
  %262 = vmatpush1.bf16.msra.mxu0 0
  %263 = vmatprep.subr.bf16.mxu0 0
  %264 = vmatpush1.bf16.msra.mxu0 0
  %265 = vmatprep.mubr.bf16.mxu0 0
  %266 = vmatmul.mubr.bf16.gmra.mrb[0].mxu0 %v231
  %v267 = vpop.f32.mrb[0].mxu0
  %v268 = vadd.f32 0.0, %v267
  %v269 = vpop.f32.mrb[0].mxu0
  %v270 = vpop.f32.mrb[0].mxu0
  %v271 = vpop.f32.mrb[0].mxu0
  %272 = vdwg.mxu0
  %v273 = vadd.f32 %v118, %v268
  %v274 = vtanh.pop %v273
  %v275 = vadd.f32 %v274, 1.0
  %v276 = vmul.f32 %v275, 0.5
  %v277 = vmul.f32 %v276, %v219
  %279 = vrot.lane.b32.xlu0 %v274, 64
  %v280 = vpop.permute.xlu0 %279
  %v282 = vmul.f32 %v276, %v280
  %284 = vrot.lane.b32.xlu0 %v282, 32
  %v285 = vpop.permute.xlu0 %284
  %v287 = vadd.f32 %v277, %v285
  %v288 = vtanh.pop %v287
  %290 = vrot.lane.b32.xlu0 %v288, 64
  %v291 = vpop.permute.xlu0 %290
  %v293 = vmul.f32 %v276, %v291
  %v294 = vpack.c.bf16 %v293, %v293
  %296 = vrot.lane.b32.xlu0 %v294, 32
  %v297 = vpop.permute.xlu0 %296
  %v299 = vsel %vm161, %v297, 0
  %301 = vmatprep.subr.bf16.mxu0 0
  %302 = vmatpush1.bf16.msra.mxu0 %v157
  %303 = vmatprep.subr.bf16.mxu0 0
  %304 = vmatpush1.bf16.msra.mxu0 %v158
  %305 = vmatprep.subr.bf16.mxu0 0
  %306 = vmatpush1.bf16.msra.mxu0 0
  %307 = vmatprep.subr.bf16.mxu0 0
  %308 = vmatpush1.bf16.msra.mxu0 0
  %309 = vmatprep.subr.bf16.mxu0 0
  %310 = vmatpush1.bf16.msra.mxu0 0
  %311 = vmatprep.subr.bf16.mxu0 0
  %312 = vmatpush1.bf16.msra.mxu0 0
  %313 = vmatprep.subr.bf16.mxu0 0
  %314 = vmatpush1.bf16.msra.mxu0 0
  %315 = vmatprep.subr.bf16.mxu0 0
  %316 = vmatpush1.bf16.msra.mxu0 0
  %317 = vmatprep.subr.bf16.mxu0 0
  %318 = vmatpush1.bf16.msra.mxu0 0
  %319 = vmatprep.subr.bf16.mxu0 0
  %320 = vmatpush1.bf16.msra.mxu0 0
  %321 = vmatprep.subr.bf16.mxu0 0
  %322 = vmatpush1.bf16.msra.mxu0 0
  %323 = vmatprep.subr.bf16.mxu0 0
  %324 = vmatpush1.bf16.msra.mxu0 0
  %325 = vmatprep.subr.bf16.mxu0 0
  %326 = vmatpush1.bf16.msra.mxu0 0
  %327 = vmatprep.subr.bf16.mxu0 0
  %328 = vmatpush1.bf16.msra.mxu0 0
  %329 = vmatprep.subr.bf16.mxu0 0
  %330 = vmatpush1.bf16.msra.mxu0 0
  %331 = vmatprep.subr.bf16.mxu0 0
  %332 = vmatpush1.bf16.msra.mxu0 0
  %333 = vmatprep.mubr.bf16.mxu0 0
  %334 = vmatmul.mubr.bf16.gmra.mrb[0].mxu0 %v299
  %v335 = vpop.f32.mrb[0].mxu0
  %v336 = vadd.f32 0.0, %v335
  %v337 = vpop.f32.mrb[0].mxu0
  %v338 = vpop.f32.mrb[0].mxu0
  %v339 = vpop.f32.mrb[0].mxu0
  %340 = vdwg.mxu0
  %v341 = vadd.f32 %v123, %v336
  %v342 = vtanh.pop %v341
  %v343 = vadd.f32 %v342, 1.0
  %v344 = vmul.f32 %v343, 0.5
  %v345 = vmul.f32 %v344, %v287
  %347 = vrot.lane.b32.xlu0 %v342, 64
  %v348 = vpop.permute.xlu0 %347
  %v350 = vmul.f32 %v344, %v348
  %352 = vrot.lane.b32.xlu0 %v350, 32
  %v353 = vpop.permute.xlu0 %352
  %v355 = vadd.f32 %v345, %v353
  %v356 = vtanh.pop %v355
  %358 = vrot.lane.b32.xlu0 %v356, 64
  %v359 = vpop.permute.xlu0 %358
  %v361 = vmul.f32 %v344, %v359
  %v362 = vpack.c.bf16 %v361, %v361
  %364 = vrot.lane.b32.xlu0 %v362, 32
  %v365 = vpop.permute.xlu0 %364
  %v367 = vsel %vm161, %v365, 0
  %369 = vmatprep.subr.bf16.mxu0 0
  %370 = vmatpush1.bf16.msra.mxu0 %v157
  %371 = vmatprep.subr.bf16.mxu0 0
  %372 = vmatpush1.bf16.msra.mxu0 %v158
  %373 = vmatprep.subr.bf16.mxu0 0
  %374 = vmatpush1.bf16.msra.mxu0 0
  %375 = vmatprep.subr.bf16.mxu0 0
  %376 = vmatpush1.bf16.msra.mxu0 0
  %377 = vmatprep.subr.bf16.mxu0 0
  %378 = vmatpush1.bf16.msra.mxu0 0
  %379 = vmatprep.subr.bf16.mxu0 0
  %380 = vmatpush1.bf16.msra.mxu0 0
  %381 = vmatprep.subr.bf16.mxu0 0
  %382 = vmatpush1.bf16.msra.mxu0 0
  %383 = vmatprep.subr.bf16.mxu0 0
  %384 = vmatpush1.bf16.msra.mxu0 0
  %385 = vmatprep.subr.bf16.mxu0 0
  %386 = vmatpush1.bf16.msra.mxu0 0
  %387 = vmatprep.subr.bf16.mxu0 0
  %388 = vmatpush1.bf16.msra.mxu0 0
  %389 = vmatprep.subr.bf16.mxu0 0
  %390 = vmatpush1.bf16.msra.mxu0 0
  %391 = vmatprep.subr.bf16.mxu0 0
  %392 = vmatpush1.bf16.msra.mxu0 0
  %393 = vmatprep.subr.bf16.mxu0 0
  %394 = vmatpush1.bf16.msra.mxu0 0
  %395 = vmatprep.subr.bf16.mxu0 0
  %396 = vmatpush1.bf16.msra.mxu0 0
  %397 = vmatprep.subr.bf16.mxu0 0
  %398 = vmatpush1.bf16.msra.mxu0 0
  %399 = vmatprep.subr.bf16.mxu0 0
  %400 = vmatpush1.bf16.msra.mxu0 0
  %401 = vmatprep.mubr.bf16.mxu0 0
  %402 = vmatmul.mubr.bf16.gmra.mrb[0].mxu0 %v367
  %v403 = vpop.f32.mrb[0].mxu0
  %v404 = vadd.f32 0.0, %v403
  %v405 = vpop.f32.mrb[0].mxu0
  %v406 = vpop.f32.mrb[0].mxu0
  %v407 = vpop.f32.mrb[0].mxu0
  %408 = vdwg.mxu0
  %v409 = vadd.f32 %v126, %v404
  %v410 = vtanh.pop %v409
  %v411 = vadd.f32 %v410, 1.0
  %v412 = vmul.f32 %v411, 0.5
  %v413 = vmul.f32 %v412, %v355
  %415 = vrot.lane.b32.xlu0 %v410, 64
  %v416 = vpop.permute.xlu0 %415
  %v418 = vmul.f32 %v412, %v416
  %420 = vrot.lane.b32.xlu0 %v418, 32
  %v421 = vpop.permute.xlu0 %420
  %v423 = vadd.f32 %v413, %v421
  %v424 = vtanh.pop %v423
  %426 = vrot.lane.b32.xlu0 %v424, 64
  %v427 = vpop.permute.xlu0 %426
  %v429 = vmul.f32 %v412, %v427
  %v430 = vpack.c.bf16 %v429, %v429
  %432 = vrot.lane.b32.xlu0 %v430, 32
  %v433 = vpop.permute.xlu0 %432
  %v435 = vsel %vm161, %v433, 0
  %437 = vmatprep.subr.bf16.mxu0 0
  %438 = vmatpush1.bf16.msra.mxu0 %v157
  %439 = vmatprep.subr.bf16.mxu0 0
  %440 = vmatpush1.bf16.msra.mxu0 %v158
  %441 = vmatprep.subr.bf16.mxu0 0
  %442 = vmatpush1.bf16.msra.mxu0 0
  %443 = vmatprep.subr.bf16.mxu0 0
  %444 = vmatpush1.bf16.msra.mxu0 0
  %445 = vmatprep.subr.bf16.mxu0 0
  %446 = vmatpush1.bf16.msra.mxu0 0
  %447 = vmatprep.subr.bf16.mxu0 0
  %448 = vmatpush1.bf16.msra.mxu0 0
  %449 = vmatprep.subr.bf16.mxu0 0
  %450 = vmatpush1.bf16.msra.mxu0 0
  %451 = vmatprep.subr.bf16.mxu0 0
  %452 = vmatpush1.bf16.msra.mxu0 0
  %453 = vmatprep.subr.bf16.mxu0 0
  %454 = vmatpush1.bf16.msra.mxu0 0
  %455 = vmatprep.subr.bf16.mxu0 0
  %456 = vmatpush1.bf16.msra.mxu0 0
  %457 = vmatprep.subr.bf16.mxu0 0
  %458 = vmatpush1.bf16.msra.mxu0 0
  %459 = vmatprep.subr.bf16.mxu0 0
  %460 = vmatpush1.bf16.msra.mxu0 0
  %461 = vmatprep.subr.bf16.mxu0 0
  %462 = vmatpush1.bf16.msra.mxu0 0
  %463 = vmatprep.subr.bf16.mxu0 0
  %464 = vmatpush1.bf16.msra.mxu0 0
  %465 = vmatprep.subr.bf16.mxu0 0
  %466 = vmatpush1.bf16.msra.mxu0 0
  %467 = vmatprep.subr.bf16.mxu0 0
  %468 = vmatpush1.bf16.msra.mxu0 0
  %469 = vmatprep.mubr.bf16.mxu0 0
  %470 = vmatmul.mubr.bf16.gmra.mrb[0].mxu0 %v435
  %v471 = vpop.f32.mrb[0].mxu0
  %v472 = vadd.f32 0.0, %v471
  %v473 = vpop.f32.mrb[0].mxu0
  %v474 = vpop.f32.mrb[0].mxu0
  %v475 = vpop.f32.mrb[0].mxu0
  %476 = vdwg.mxu0
  %v477 = vadd.f32 %v131, %v472
  %v478 = vtanh.pop %v477
  %v479 = vadd.f32 %v478, 1.0
  %v480 = vmul.f32 %v479, 0.5
  %v481 = vmul.f32 %v480, %v423
  %483 = vrot.lane.b32.xlu0 %v478, 64
  %v484 = vpop.permute.xlu0 %483
  %v486 = vmul.f32 %v480, %v484
  %488 = vrot.lane.b32.xlu0 %v486, 32
  %v489 = vpop.permute.xlu0 %488
  %v491 = vadd.f32 %v481, %v489
  %v492 = vtanh.pop %v491
  %494 = vrot.lane.b32.xlu0 %v492, 64
  %v495 = vpop.permute.xlu0 %494
  %v497 = vmul.f32 %v480, %v495
  %v498 = vpack.c.bf16 %v497, %v497
  %500 = vrot.lane.b32.xlu0 %v498, 32
  %v501 = vpop.permute.xlu0 %500
  %v503 = vsel %vm161, %v501, 0
  %505 = vmatprep.subr.bf16.mxu0 0
  %506 = vmatpush1.bf16.msra.mxu0 %v157
  %507 = vmatprep.subr.bf16.mxu0 0
  %508 = vmatpush1.bf16.msra.mxu0 %v158
  %509 = vmatprep.subr.bf16.mxu0 0
  %510 = vmatpush1.bf16.msra.mxu0 0
  %511 = vmatprep.subr.bf16.mxu0 0
  %512 = vmatpush1.bf16.msra.mxu0 0
  %513 = vmatprep.subr.bf16.mxu0 0
  %514 = vmatpush1.bf16.msra.mxu0 0
  %515 = vmatprep.subr.bf16.mxu0 0
  %516 = vmatpush1.bf16.msra.mxu0 0
  %517 = vmatprep.subr.bf16.mxu0 0
  %518 = vmatpush1.bf16.msra.mxu0 0
  %519 = vmatprep.subr.bf16.mxu0 0
  %520 = vmatpush1.bf16.msra.mxu0 0
  %521 = vmatprep.subr.bf16.mxu0 0
  %522 = vmatpush1.bf16.msra.mxu0 0
  %523 = vmatprep.subr.bf16.mxu0 0
  %524 = vmatpush1.bf16.msra.mxu0 0
  %525 = vmatprep.subr.bf16.mxu0 0
  %526 = vmatpush1.bf16.msra.mxu0 0
  %527 = vmatprep.subr.bf16.mxu0 0
  %528 = vmatpush1.bf16.msra.mxu0 0
  %529 = vmatprep.subr.bf16.mxu0 0
  %530 = vmatpush1.bf16.msra.mxu0 0
  %531 = vmatprep.subr.bf16.mxu0 0
  %532 = vmatpush1.bf16.msra.mxu0 0
  %533 = vmatprep.subr.bf16.mxu0 0
  %534 = vmatpush1.bf16.msra.mxu0 0
  %535 = vmatprep.subr.bf16.mxu0 0
  %536 = vmatpush1.bf16.msra.mxu0 0
  %537 = vmatprep.mubr.bf16.mxu0 0
  %538 = vmatmul.mubr.bf16.gmra.mrb[0].mxu0 %v503
  %v539 = vpop.f32.mrb[0].mxu0
  %v540 = vadd.f32 0.0, %v539
  %v541 = vpop.f32.mrb[0].mxu0
  %v542 = vpop.f32.mrb[0].mxu0
  %v543 = vpop.f32.mrb[0].mxu0
  %544 = vdwg.mxu0
  %v545 = vadd.f32 %v134, %v540
  %v546 = vtanh.pop %v545
  %v547 = vadd.f32 %v546, 1.0
  %v548 = vmul.f32 %v547, 0.5
  %v549 = vmul.f32 %v548, %v491
  %551 = vrot.lane.b32.xlu0 %v546, 64
  %v552 = vpop.permute.xlu0 %551
  %v554 = vmul.f32 %v548, %v552
  %556 = vrot.lane.b32.xlu0 %v554, 32
  %v557 = vpop.permute.xlu0 %556
  %v559 = vadd.f32 %v549, %v557
  %v560 = vtanh.pop %v559
  %562 = vrot.lane.b32.xlu0 %v560, 64
  %v563 = vpop.permute.xlu0 %562
  %v565 = vmul.f32 %v548, %v563
  %v566 = vpack.c.bf16 %v565, %v565
  %568 = vrot.lane.b32.xlu0 %v566, 32
  %v569 = vpop.permute.xlu0 %568
  %v571 = vsel %vm161, %v569, 0
  %573 = vmatprep.subr.bf16.mxu0 0
  %574 = vmatpush1.bf16.msra.mxu0 %v157
  %575 = vmatprep.subr.bf16.mxu0 0
  %576 = vmatpush1.bf16.msra.mxu0 %v158
  %577 = vmatprep.subr.bf16.mxu0 0
  %578 = vmatpush1.bf16.msra.mxu0 0
  %579 = vmatprep.subr.bf16.mxu0 0
  %580 = vmatpush1.bf16.msra.mxu0 0
  %581 = vmatprep.subr.bf16.mxu0 0
  %582 = vmatpush1.bf16.msra.mxu0 0
  %583 = vmatprep.subr.bf16.mxu0 0
  %584 = vmatpush1.bf16.msra.mxu0 0
  %585 = vmatprep.subr.bf16.mxu0 0
  %586 = vmatpush1.bf16.msra.mxu0 0
  %587 = vmatprep.subr.bf16.mxu0 0
  %588 = vmatpush1.bf16.msra.mxu0 0
  %589 = vmatprep.subr.bf16.mxu0 0
  %590 = vmatpush1.bf16.msra.mxu0 0
  %591 = vmatprep.subr.bf16.mxu0 0
  %592 = vmatpush1.bf16.msra.mxu0 0
  %593 = vmatprep.subr.bf16.mxu0 0
  %594 = vmatpush1.bf16.msra.mxu0 0
  %595 = vmatprep.subr.bf16.mxu0 0
  %596 = vmatpush1.bf16.msra.mxu0 0
  %597 = vmatprep.subr.bf16.mxu0 0
  %598 = vmatpush1.bf16.msra.mxu0 0
  %599 = vmatprep.subr.bf16.mxu0 0
  %600 = vmatpush1.bf16.msra.mxu0 0
  %601 = vmatprep.subr.bf16.mxu0 0
  %602 = vmatpush1.bf16.msra.mxu0 0
  %603 = vmatprep.subr.bf16.mxu0 0
  %604 = vmatpush1.bf16.msra.mxu0 0
  %605 = vmatprep.mubr.bf16.mxu0 0
  %606 = vmatmul.mubr.bf16.gmra.mrb[0].mxu0 %v571
  %v607 = vpop.f32.mrb[0].mxu0
  %v608 = vadd.f32 0.0, %v607
  %v609 = vpop.f32.mrb[0].mxu0
  %v610 = vpop.f32.mrb[0].mxu0
  %v611 = vpop.f32.mrb[0].mxu0
  %612 = vdwg.mxu0
  %v613 = vadd.f32 %v139, %v608
  %v614 = vtanh.pop %v613
  %v615 = vadd.f32 %v614, 1.0
  %v616 = vmul.f32 %v615, 0.5
  %v617 = vmul.f32 %v616, %v559
  %619 = vrot.lane.b32.xlu0 %v614, 64
  %v620 = vpop.permute.xlu0 %619
  %v622 = vmul.f32 %v616, %v620
  %624 = vrot.lane.b32.xlu0 %v622, 32
  %v625 = vpop.permute.xlu0 %624
  %v627 = vadd.f32 %v617, %v625
  %v628 = vtanh.pop %v627
  %630 = vrot.lane.b32.xlu0 %v628, 64
  %v631 = vpop.permute.xlu0 %630
  %v633 = vmul.f32 %v616, %v631
  %v634 = vpack.c.bf16 %v633, %v633
  %636 = vrot.lane.b32.xlu0 %v634, 32
  %v637 = vpop.permute.xlu0 %636
  %v639 = vsel %vm161, %v637, 0
  %641 = vmatprep.subr.bf16.mxu0 0
  %642 = vmatpush1.bf16.msra.mxu0 %v157
  %643 = vmatprep.subr.bf16.mxu0 0
  %644 = vmatpush1.bf16.msra.mxu0 %v158
  %645 = vmatprep.subr.bf16.mxu0 0
  %646 = vmatpush1.bf16.msra.mxu0 0
  %647 = vmatprep.subr.bf16.mxu0 0
  %648 = vmatpush1.bf16.msra.mxu0 0
  %649 = vmatprep.subr.bf16.mxu0 0
  %650 = vmatpush1.bf16.msra.mxu0 0
  %651 = vmatprep.subr.bf16.mxu0 0
  %652 = vmatpush1.bf16.msra.mxu0 0
  %653 = vmatprep.subr.bf16.mxu0 0
  %654 = vmatpush1.bf16.msra.mxu0 0
  %655 = vmatprep.subr.bf16.mxu0 0
  %656 = vmatpush1.bf16.msra.mxu0 0
  %657 = vmatprep.subr.bf16.mxu0 0
  %658 = vmatpush1.bf16.msra.mxu0 0
  %659 = vmatprep.subr.bf16.mxu0 0
  %660 = vmatpush1.bf16.msra.mxu0 0
  %661 = vmatprep.subr.bf16.mxu0 0
  %662 = vmatpush1.bf16.msra.mxu0 0
  %663 = vmatprep.subr.bf16.mxu0 0
  %664 = vmatpush1.bf16.msra.mxu0 0
  %665 = vmatprep.subr.bf16.mxu0 0
  %666 = vmatpush1.bf16.msra.mxu0 0
  %667 = vmatprep.subr.bf16.mxu0 0
  %668 = vmatpush1.bf16.msra.mxu0 0
  %669 = vmatprep.subr.bf16.mxu0 0
  %670 = vmatpush1.bf16.msra.mxu0 0
  %671 = vmatprep.subr.bf16.mxu0 0
  %672 = vmatpush1.bf16.msra.mxu0 0
  %673 = vmatprep.mubr.bf16.mxu0 0
  %674 = vmatmul.mubr.bf16.gmra.mrb[0].mxu0 %v639
  %v675 = vpop.f32.mrb[0].mxu0
  %v676 = vadd.f32 0.0, %v675
  %v677 = vpop.f32.mrb[0].mxu0
  %v678 = vpop.f32.mrb[0].mxu0
  %v679 = vpop.f32.mrb[0].mxu0
  %680 = vdwg.mxu0
  %v681 = vadd.f32 %v142, %v676
  %v682 = vtanh.pop %v681
  %v683 = vadd.f32 %v682, 1.0
  %v684 = vmul.f32 %v683, 0.5
  %v685 = vmul.f32 %v684, %v627
  %687 = vrot.lane.b32.xlu0 %v682, 64
  %v688 = vpop.permute.xlu0 %687
  %v690 = vmul.f32 %v684, %v688
  %692 = vrot.lane.b32.xlu0 %v690, 32
  %v693 = vpop.permute.xlu0 %692
  %v695 = vadd.f32 %v685, %v693
  %v696 = vtanh.pop %v695
  %698 = vrot.lane.b32.xlu0 %v696, 64
  %v699 = vpop.permute.xlu0 %698
  %v701 = vmul.f32 %v684, %v699
  %v702 = vld [vmem:[%s4] sm:$0xff]
  %v703 = vld [vmem:[%s4 + $0x8] sm:$0xff]
  %v704 = vld [vmem:[%s4 + $0x10] sm:$0xff]
  %v705 = vld [vmem:[%s4 + $0x18] sm:$0xff]
  %v706 = vld [vmem:[%s5] sm:$0x1]
  %v708 = vlaneseq
  %v709 = vshrl.u32 %v708, 7
  %v710 = vsub.s32 0, %v709
  %v711 = vrot.slane %v706, %v710
  %714 = vrot.lane.b32.xlu0 %v701, 32
  %v715 = vpop.permute.xlu0 %714
  %v716 = vsel %vm161, %v715, 0
  %718 = vmatprep.subr.mxu0 0.0
  %719 = vmatpush1.msra.mxu0 %v702
  %720 = vmatprep.subr.mxu0 0.0
  %721 = vmatpush1.msra.mxu0 %v703
  %722 = vmatprep.subr.mxu0 0.0
  %723 = vmatpush1.msra.mxu0 %v704
  %724 = vmatprep.subr.mxu0 0.0
  %725 = vmatpush1.msra.mxu0 %v705
  %726 = vmatprep.subr.mxu0 0.0
  %727 = vmatpush1.msra.mxu0 0.0
  %728 = vmatprep.subr.mxu0 0.0
  %729 = vmatpush1.msra.mxu0 0.0
  %730 = vmatprep.subr.mxu0 0.0
  %731 = vmatpush1.msra.mxu0 0.0
  %732 = vmatprep.subr.mxu0 0.0
  %733 = vmatpush1.msra.mxu0 0.0
  %734 = vmatprep.subr.mxu0 0.0
  %735 = vmatpush1.msra.mxu0 0.0
  %736 = vmatprep.subr.mxu0 0.0
  %737 = vmatpush1.msra.mxu0 0.0
  %738 = vmatprep.subr.mxu0 0.0
  %739 = vmatpush1.msra.mxu0 0.0
  %740 = vmatprep.subr.mxu0 0.0
  %741 = vmatpush1.msra.mxu0 0.0
  %742 = vmatprep.subr.mxu0 0.0
  %743 = vmatpush1.msra.mxu0 0.0
  %744 = vmatprep.subr.mxu0 0.0
  %745 = vmatpush1.msra.mxu0 0.0
  %746 = vmatprep.subr.mxu0 0.0
  %747 = vmatpush1.msra.mxu0 0.0
  %748 = vmatprep.subr.mxu0 0.0
  %749 = vmatpush1.msra.mxu0 0.0
  %750 = vmatprep.subr.mxu0 0.0
  %751 = vmatpush1.msra.mxu0 0.0
  %752 = vmatprep.subr.mxu0 0.0
  %753 = vmatpush1.msra.mxu0 0.0
  %754 = vmatprep.subr.mxu0 0.0
  %755 = vmatpush1.msra.mxu0 0.0
  %756 = vmatprep.subr.mxu0 0.0
  %757 = vmatpush1.msra.mxu0 0.0
  %758 = vmatprep.subr.mxu0 0.0
  %759 = vmatpush1.msra.mxu0 0.0
  %760 = vmatprep.subr.mxu0 0.0
  %761 = vmatpush1.msra.mxu0 0.0
  %762 = vmatprep.subr.mxu0 0.0
  %763 = vmatpush1.msra.mxu0 0.0
  %764 = vmatprep.subr.mxu0 0.0
  %765 = vmatpush1.msra.mxu0 0.0
  %766 = vmatprep.subr.mxu0 0.0
  %767 = vmatpush1.msra.mxu0 0.0
  %768 = vmatprep.subr.mxu0 0.0
  %769 = vmatpush1.msra.mxu0 0.0
  %770 = vmatprep.subr.mxu0 0.0
  %771 = vmatpush1.msra.mxu0 0.0
  %772 = vmatprep.subr.mxu0 0.0
  %773 = vmatpush1.msra.mxu0 0.0
  %774 = vmatprep.subr.mxu0 0.0
  %775 = vmatpush1.msra.mxu0 0.0
  %776 = vmatprep.subr.mxu0 0.0
  %777 = vmatpush1.msra.mxu0 0.0
  %778 = vmatprep.subr.mxu0 0.0
  %779 = vmatpush1.msra.mxu0 0.0
  %780 = vmatprep.subr.mxu0 0.0
  %781 = vmatpush1.msra.mxu0 0.0
  %782 = vmatprep.mubr.f32.mxu0 0.0
  %783 = vmatmul.mubr.f32.gmra.mrb[0].mxu0 %v716
  %v784 = vpop.f32.mrb[0].mxu0
  %v785 = vadd.f32 %v711, %v784
  %v786 = vpop.f32.mrb[0].mxu0
  %787 = vdwg.mxu0
  %788 = vst [vmem:[%s6] sm:$0xff] %v785
  // Predicated region
  $region26: #{lstm_tagger_forward.1} parent=0 // pred_check
    _
  $region27: #{lstm_tagger_forward.1} parent=0 // pred_check_branch
    %790 = sbr.rel (0) target = $region29
  $region28: #{lstm_tagger_forward.1} parent=0 // pred_region
    _
  $region29: #{lstm_tagger_forward.1} parent=0 // pred_fallthru
    _
  // Predicated region
  $region30: #{lstm_tagger_forward.1} parent=0 // pred_check
    _
  $region31: #{lstm_tagger_forward.1} parent=0 // pred_check_branch
    %792 = sbr.rel (0) target = $region33
  $region32: #{lstm_tagger_forward.1} parent=0 // pred_region
    _
  $region33: #{lstm_tagger_forward.1} parent=0 // pred_fallthru
    _

</llo_original>
